<compile_context>
chip_gen: v6e
topology: v6e:2x2x1
jax: 0.10.0
libtpu: 0.0.40
codegen_flags: <defaults>
</compile_context>

<pallas_src>
import jax
import jax.numpy as jnp
from jax.experimental import pallas as pl
from jax.experimental.pallas import tpu as pltpu

K_IN = 784          # 28 * 28
K_PAD = 896         # 7 * 128  (zero-padded contraction dim)
HIDDEN = 256


def _round_up(x, m):
    return ((x + m - 1) // m) * m


def encoder_kernel(x_ref, w1_ref, b1_ref, w2_ref, b2_ref, o_ref):
    # Layer 1: bf16 MXU matmul, f32 accumulate; bias + ReLU in f32 on the VPU.
    h = jnp.dot(x_ref[...], w1_ref[...], preferred_element_type=jnp.float32)
    h = jnp.maximum(h + b1_ref[...], 0.0)
    # Layer 2: cast activations to bf16 only for the MXU; accumulate in f32.
    o = jnp.dot(h.astype(jnp.bfloat16), w2_ref[...],
                preferred_element_type=jnp.float32)
    o = jnp.maximum(o + b2_ref[...], 0.0)
    o_ref[...] = o.astype(o_ref.dtype)


def encoder_forward(x, w1, b1, w2, b2, *, tm=256):
    """x: [B, 1, 28, 28] float32 -> [B, encoding_dim] float32.

    w1: [784, 256], b1: [256] or [1, 256], w2: [256, E], b2: [E] or [1, E]
    (weights stored transposed vs. torch so the kernel computes x @ W).
    """
    B = x.shape[0]
    E = w2.shape[1]
    Ep = _round_up(max(E, 128), 128)          # lane-dense output tile

    # Batch tile: multiple of 8 sublanes, up to `tm` rows (256 keeps the
    # v6e/v7x 256-row MXU full when the batch is large enough).
    tm_eff = min(tm, _round_up(B, 8))
    Bp = _round_up(B, tm_eff)
    grid = (Bp // tm_eff,)

    # --- Host-side layout prep (plain JAX): flatten, pad, cast to bf16 ---
    x2d = x.reshape(B, K_IN).astype(jnp.float32)
    xp = jnp.pad(x2d.astype(jnp.bfloat16),
                 ((0, Bp - B), (0, K_PAD - K_IN)))                # [Bp, 896] bf16
    w1p = jnp.pad(w1.astype(jnp.bfloat16),
                  ((0, K_PAD - K_IN), (0, 0)))                    # [896, 256] bf16
    w2p = jnp.pad(w2.astype(jnp.bfloat16),
                  ((0, 0), (0, Ep - E)))                          # [256, Ep] bf16
    b1f = b1.reshape(1, HIDDEN).astype(jnp.float32)               # [1, 256] f32
    b2p = jnp.pad(b2.reshape(1, E).astype(jnp.float32),
                  ((0, 0), (0, Ep - E)))                          # [1, Ep] f32

    # VMEM budget: double-buffered x/out tiles + resident weights + headroom.
    vmem_bytes = (
        2 * tm_eff * K_PAD * 2        # x tiles (bf16, double-buffered)
        + 2 * tm_eff * Ep * 4         # out tiles (f32, double-buffered)
        + K_PAD * HIDDEN * 2          # W1 resident (bf16)
        + HIDDEN * Ep * 2             # W2 resident (bf16)
        + HIDDEN * 4 + Ep * 4         # biases (f32)
    )
    vmem_limit = int(min(max(2 * vmem_bytes, 4 << 20), 64 << 20))

    out = pl.pallas_call(
        encoder_kernel,
        out_shape=jax.ShapeDtypeStruct((Bp, Ep), jnp.float32),
        grid_spec=pltpu.PrefetchScalarGridSpec(
            num_scalar_prefetch=0,
            grid=grid,
            in_specs=[
                pl.BlockSpec((tm_eff, K_PAD), lambda i: (i, 0)),   # x tile
                pl.BlockSpec((K_PAD, HIDDEN), lambda i: (0, 0)),   # W1 (resident)
                pl.BlockSpec((1, HIDDEN), lambda i: (0, 0)),       # b1 (resident)
                pl.BlockSpec((HIDDEN, Ep), lambda i: (0, 0)),      # W2 (resident)
                pl.BlockSpec((1, Ep), lambda i: (0, 0)),           # b2 (resident)
            ],
            out_specs=pl.BlockSpec((tm_eff, Ep), lambda i: (i, 0)),
        ),
        compiler_params=pltpu.CompilerParams(
            dimension_semantics=("parallel",),   # 2-TC sharding on v7x
            vmem_limit_bytes=vmem_limit,
        ),
    )(xp, w1p, b1f, w2p, b2p)

    return out[:B, :E]


def init_params(key, encoding_dim):
    """Deterministic synthetic init (uniform, like torch's default range)."""
    k1, k2, k3, k4 = jax.random.split(key, 4)
    bound1 = 1.0 / (K_IN ** 0.5)
    bound2 = 1.0 / (HIDDEN ** 0.5)
    w1 = jax.random.uniform(k1, (K_IN, HIDDEN), jnp.float32, -bound1, bound1)
    b1 = jax.random.uniform(k2, (1, HIDDEN), jnp.float32, -bound1, bound1)
    w2 = jax.random.uniform(k3, (HIDDEN, encoding_dim), jnp.float32, -bound2, bound2)
    b2 = jax.random.uniform(k4, (1, encoding_dim), jnp.float32, -bound2, bound2)
    return w1, b1, w2, b2


if __name__ == "__main__":
    key = jax.random.PRNGKey(0)
    kx, kp = jax.random.split(key)

    encoding_dim = 32
    batch = 16
    # Input consistent with the module's 28*28 flatten (MNIST-like, NCHW).
    x = jax.random.normal(kx, (batch, 1, 28, 28), jnp.float32)
    w1, b1, w2, b2 = init_params(kp, encoding_dim)

    out = encoder_forward(x, w1, b1, w2, b2)
    out = jax.block_until_ready(out)

    # Pure-JAX reference with the same bf16-operand / f32-accumulate path.
    xb = x.reshape(batch, K_IN).astype(jnp.bfloat16).astype(jnp.float32)
    w1b = w1.astype(jnp.bfloat16).astype(jnp.float32)
    w2b = w2.astype(jnp.bfloat16).astype(jnp.float32)
    h_ref = jnp.maximum(xb @ w1b + b1, 0.0)
    h_refb = h_ref.astype(jnp.bfloat16).astype(jnp.float32)
    ref = jnp.maximum(h_refb @ w2b + b2, 0.0)

    assert out.shape == (batch, encoding_dim)
    assert jnp.allclose(out, ref, atol=2e-2, rtol=2e-2), (
        float(jnp.max(jnp.abs(out - ref))))

    print("KERNEL_OK")
</pallas_src>

<mosaic_0001>
module attributes {stable_mosaic.version = 11 : i64} {
  func.func @encoder_kernel(%arg0: i32, %arg1: memref<16x896xbf16, #tpu.memory_space<vmem>>, %arg2: memref<896x256xbf16, #tpu.memory_space<vmem>>, %arg3: memref<1x256xf32, #tpu.memory_space<vmem>>, %arg4: memref<256x128xbf16, #tpu.memory_space<vmem>>, %arg5: memref<1x128xf32, #tpu.memory_space<vmem>>, %arg6: memref<16x128xf32, #tpu.memory_space<vmem>>) attributes {dimension_semantics = [#tpu.dimension_semantics<parallel>], iteration_bounds = array<i64: 1>, scalar_prefetch = 0 : i64, scratch_operands = 0 : i64, tpu.core_type = #tpu.core_type<tc>, window_params = [{transform_indices = @transform_0, window_bounds = array<i64: 16, 896>}, {pipeline_mode = #tpu.pipeline_mode<synchronous>, transform_indices = @transform_1, window_bounds = array<i64: 896, 256>}, {pipeline_mode = #tpu.pipeline_mode<synchronous>, transform_indices = @transform_2, window_bounds = array<i64: 1, 256>}, {pipeline_mode = #tpu.pipeline_mode<synchronous>, transform_indices = @transform_3, window_bounds = array<i64: 256, 128>}, {pipeline_mode = #tpu.pipeline_mode<synchronous>, transform_indices = @transform_4, window_bounds = array<i64: 1, 128>}, {transform_indices = @transform_5, window_bounds = array<i64: 16, 128>}]} {
    %c0 = arith.constant 0 : index
    %c0_0 = arith.constant 0 : index
    %0 = vector.load %arg1[%c0, %c0_0] : memref<16x896xbf16, #tpu.memory_space<vmem>>, vector<16x896xbf16>
    %c0_1 = arith.constant 0 : index
    %c0_2 = arith.constant 0 : index
    %1 = vector.load %arg2[%c0_1, %c0_2] : memref<896x256xbf16, #tpu.memory_space<vmem>>, vector<896x256xbf16>
    %cst = arith.constant dense<0.000000e+00> : vector<16x256xf32>
    %2 = tpu.matmul %0, %1, %cst {dimension_numbers = #tpu.dot_dimension_numbers<[1], [0], [0], [1], [0, 0, 1, 1], [], []>} : vector<16x896xbf16>, vector<896x256xbf16>, vector<16x256xf32> -> vector<16x256xf32>
    %c0_3 = arith.constant 0 : index
    %c0_4 = arith.constant 0 : index
    %3 = vector.load %arg3[%c0_3, %c0_4] : memref<1x256xf32, #tpu.memory_space<vmem>>, vector<1x256xf32>
    %4 = vector.broadcast %3 : vector<1x256xf32> to vector<16x256xf32>
    %5 = arith.addf %2, %4 : vector<16x256xf32>
    %cst_5 = arith.constant 0.000000e+00 : f32
    %6 = vector.broadcast %cst_5 : f32 to vector<16x256xf32>
    %7 = arith.maximumf %5, %6 : vector<16x256xf32>
    %8 = arith.truncf %7 : vector<16x256xf32> to vector<16x256xbf16>
    %c0_6 = arith.constant 0 : index
    %c0_7 = arith.constant 0 : index
    %9 = vector.load %arg4[%c0_6, %c0_7] : memref<256x128xbf16, #tpu.memory_space<vmem>>, vector<256x128xbf16>
    %cst_8 = arith.constant dense<0.000000e+00> : vector<16x128xf32>
    %10 = tpu.matmul %8, %9, %cst_8 {dimension_numbers = #tpu.dot_dimension_numbers<[1], [0], [0], [1], [0, 0, 1, 1], [], []>} : vector<16x256xbf16>, vector<256x128xbf16>, vector<16x128xf32> -> vector<16x128xf32>
    %c0_9 = arith.constant 0 : index
    %c0_10 = arith.constant 0 : index
    %11 = vector.load %arg5[%c0_9, %c0_10] : memref<1x128xf32, #tpu.memory_space<vmem>>, vector<1x128xf32>
    %12 = vector.broadcast %11 : vector<1x128xf32> to vector<16x128xf32>
    %13 = arith.addf %10, %12 : vector<16x128xf32>
    %cst_11 = arith.constant 0.000000e+00 : f32
    %14 = vector.broadcast %cst_11 : f32 to vector<16x128xf32>
    %15 = arith.maximumf %13, %14 : vector<16x128xf32>
    %c0_12 = arith.constant 0 : index
    %c0_13 = arith.constant 0 : index
    %16 = vector.load %arg6[%c0_12, %c0_13] : memref<16x128xf32, #tpu.memory_space<vmem>>, vector<16x128xf32>
    tpu.vector_store %arg6[%c0_12, %c0_13], %15 {strides = array<i32>} : memref<16x128xf32, #tpu.memory_space<vmem>>, vector<16x128xf32>,
    return
  }
  func.func @transform_0(%arg0: i32) -> (i32, i32) {
    %c0_i32 = arith.constant 0 : i32
    %c0_i32_0 = arith.constant 0 : i32
    return %arg0, %c0_i32 : i32, i32
  }
  func.func @transform_1(%arg0: i32) -> (i32, i32) {
    %c0_i32 = arith.constant 0 : i32
    %c0_i32_0 = arith.constant 0 : i32
    %c0_i32_1 = arith.constant 0 : i32
    return %c0_i32, %c0_i32_0 : i32, i32
  }
  func.func @transform_2(%arg0: i32) -> (i32, i32) {
    %c0_i32 = arith.constant 0 : i32
    %c0_i32_0 = arith.constant 0 : i32
    %c0_i32_1 = arith.constant 0 : i32
    return %c0_i32, %c0_i32_0 : i32, i32
  }
  func.func @transform_3(%arg0: i32) -> (i32, i32) {
    %c0_i32 = arith.constant 0 : i32
    %c0_i32_0 = arith.constant 0 : i32
    %c0_i32_1 = arith.constant 0 : i32
    return %c0_i32, %c0_i32_0 : i32, i32
  }
  func.func @transform_4(%arg0: i32) -> (i32, i32) {
    %c0_i32 = arith.constant 0 : i32
    %c0_i32_0 = arith.constant 0 : i32
    %c0_i32_1 = arith.constant 0 : i32
    return %c0_i32, %c0_i32_0 : i32, i32
  }
  func.func @transform_5(%arg0: i32) -> (i32, i32) {
    %c0_i32 = arith.constant 0 : i32
    %c0_i32_0 = arith.constant 0 : i32
    return %arg0, %c0_i32 : i32, i32
  }
}

</mosaic_0001>

<llo_original>
// kernel: tpu_custom_call.1
$region0: #{tpu_custom_call.1}
  #allocation0 [shape = 'u32[]', space=smem, size = 0x4, offset = 0x4, fixed_abs, tag = 'smem constant byte address 0x4 - core index']
  #allocation1 [shape = 'u32[144,128]{1,0:T(1,128)}', space=vmem, size = 0x12000, scoped, tag = 'internal scratch']
  %s0 = inlined_call_operand.hbm [shape: bf16[16,896], index: 0, kind: input, shape index: {}]
  %s1 = inlined_call_operand.hbm [shape: bf16[896,256], index: 1, kind: input, shape index: {}]
  %s2 = inlined_call_operand.vmem [shape: f32[1,256], index: 2, kind: input, shape index: {}]
  %s3 = inlined_call_operand.hbm [shape: bf16[256,128], index: 3, kind: input, shape index: {}]
  %s4 = inlined_call_operand.vmem [shape: f32[1,128], index: 4, kind: input, shape index: {}]
  %s5 = inlined_call_operand.hbm [shape: f32[16,128], index: 5, kind: output, shape index: {}]
  %s6 = sld [smem:[#allocation0]]
  $region42: #{tpu_custom_call.1} parent=0
    _
  %s8 = ssub.s32 1, %s6
  %s9 = scalar_select 0, %s8, %s6
  $region1: #{tpu_custom_call.1} parent=0
    #allocation2 [shape = 'u8[28672]{0}', space=vmem, size = 0x7000, scoped, tag = 'input window, operand 0, single buffered']
    #allocation3 [shape = 's32[1]{0}', space=sflag, size = 0x4, scoped, tag = 'scoped memory for tpu_custom_call.1']
    #allocation4 [shape = 's32[1]{0}', space=sflag, size = 0x4, scoped, tag = 'scoped memory for tpu_custom_call.1']
    #allocation5 [shape = 'u8[458752]{0}', space=vmem, size = 0x70000, scoped, tag = 'input window, operand 1, single buffered']
    #allocation6 [shape = 's32[1]{0}', space=sflag, size = 0x4, scoped, tag = 'scoped memory for tpu_custom_call.1']
    #allocation7 [shape = 'u8[65536]{0}', space=vmem, size = 0x10000, scoped, tag = 'input window, operand 3, single buffered']
    #allocation8 [shape = 'u8[8192]{0}', space=vmem, size = 0x2000, scoped, tag = 'output window, operand 0, single buffered']
    %10 = vsyncpa [#allocation3], 0
    %11 = vsyncpa [#allocation6], 0
    %12 = vsyncpa [#allocation4], 0
    // Predicated region
    $region2: #{tpu_custom_call.1} parent=1 // pred_check
      _
    $region3: #{tpu_custom_call.1} parent=1 // pred_check_branch
      %14 = sbr.rel (0) target = $region5
    $region4: #{tpu_custom_call.1} parent=1 // pred_region
      %s16 = ssub.s32 896, 896
      %17 = vsyncadd [#allocation3], %s16
      %s18 = sshll.u32 [#allocation2], 4
      %s19 = int_to_ptr.vmem [resolvable:$true] %s18
      %24 = dma.hbm_to_vmem [thread:$0]  %s0, 896, %s19, [#allocation3], 448, 448, 28
    $region5: #{tpu_custom_call.1} parent=1 // pred_fallthru
      _
    // Predicated region
    $region6: #{tpu_custom_call.1} parent=1 // pred_check
      _
    $region7: #{tpu_custom_call.1} parent=1 // pred_check_branch
      %26 = sbr.rel (0) target = $region9
    $region8: #{tpu_custom_call.1} parent=1 // pred_region
      %s28 = ssub.s32 14336, 14336
      %29 = vsyncadd [#allocation6], %s28
      %s30 = sshll.u32 [#allocation5], 4
      %s31 = int_to_ptr.vmem [resolvable:$true] %s30
      %36 = dma.hbm_to_vmem [thread:$0]  %s1, 14336, %s31, [#allocation6], 128, 128, 8
    $region9: #{tpu_custom_call.1} parent=1 // pred_fallthru
      _
    // Predicated region
    $region10: #{tpu_custom_call.1} parent=1 // pred_check
      _
    $region11: #{tpu_custom_call.1} parent=1 // pred_check_branch
      %38 = sbr.rel (0) target = $region13
    $region12: #{tpu_custom_call.1} parent=1 // pred_region
      _
    $region13: #{tpu_custom_call.1} parent=1 // pred_fallthru
      _
    // Predicated region
    $region14: #{tpu_custom_call.1} parent=1 // pred_check
      _
    $region15: #{tpu_custom_call.1} parent=1 // pred_check_branch
      %40 = sbr.rel (0) target = $region17
    $region16: #{tpu_custom_call.1} parent=1 // pred_region
      %s42 = ssub.s32 2048, 2048
      %43 = vsyncadd [#allocation6], %s42
      %s44 = sshll.u32 [#allocation7], 4
      %s45 = int_to_ptr.vmem [resolvable:$true] %s44
      %50 = dma.hbm_to_vmem [thread:$0]  %s3, 2048, %s45, [#allocation6], 64, 64, 4
    $region17: #{tpu_custom_call.1} parent=1 // pred_fallthru
      _
    // Predicated region
    $region18: #{tpu_custom_call.1} parent=1 // pred_check
      _
    $region19: #{tpu_custom_call.1} parent=1 // pred_check_branch
      %52 = sbr.rel (0) target = $region21
    $region20: #{tpu_custom_call.1} parent=1 // pred_region
      _
    $region21: #{tpu_custom_call.1} parent=1 // pred_fallthru
      _
    // Predicated region
    $region22: #{tpu_custom_call.1} parent=1 // pred_check
      _
    $region23: #{tpu_custom_call.1} parent=1 // pred_check_branch
      %54 = sbr.rel (0) target = $region25
    $region24: #{tpu_custom_call.1} parent=1 // pred_region
      %55 = dma.done [#allocation3], 896
    $region25: #{tpu_custom_call.1} parent=1 // pred_fallthru
      _
    // Predicated region
    $region26: #{tpu_custom_call.1} parent=1 // pred_check
      _
    $region27: #{tpu_custom_call.1} parent=1 // pred_check_branch
      %57 = sbr.rel (0) target = $region29
    $region28: #{tpu_custom_call.1} parent=1 // pred_region
      %58 = dma.done [#allocation6], 14336
    $region29: #{tpu_custom_call.1} parent=1 // pred_fallthru
      _
    // Predicated region
    $region30: #{tpu_custom_call.1} parent=1 // pred_check
      _
    $region31: #{tpu_custom_call.1} parent=1 // pred_check_branch
      %60 = sbr.rel (0) target = $region33
    $region32: #{tpu_custom_call.1} parent=1 // pred_region
      %61 = dma.done [#allocation6], 2048
    $region33: #{tpu_custom_call.1} parent=1 // pred_fallthru
      _
    %v63 = vld [vmem:[#allocation2] sm:$0xff]
    %v64 = vld [vmem:[#allocation2 + $0x8] sm:$0xff]
    %v65 = vld [vmem:[#allocation2 + $0x10] sm:$0xff]
    %v66 = vld [vmem:[#allocation2 + $0x18] sm:$0xf]
    %v67 = vld [vmem:[#allocation2 + $0x1c] sm:$0xff]
    %v68 = vld [vmem:[#allocation2 + $0x24] sm:$0xff]
    %v69 = vld [vmem:[#allocation2 + $0x2c] sm:$0xff]
    %v70 = vld [vmem:[#allocation2 + $0x34] sm:$0xf]
    %v71 = vld [vmem:[#allocation5] sm:$0xff]
    %v72 = vld [vmem:[#allocation5 + $0x8] sm:$0xff]
    %v73 = vld [vmem:[#allocation5 + $0x10] sm:$0xff]
    %v74 = vld [vmem:[#allocation5 + $0x18] sm:$0xff]
    %v75 = vld [vmem:[#allocation5 + $0x20] sm:$0xff]
    %v76 = vld [vmem:[#allocation5 + $0x28] sm:$0xff]
    %v77 = vld [vmem:[#allocation5 + $0x30] sm:$0xff]
    %v78 = vld [vmem:[#allocation5 + $0x38] sm:$0xff]
    %v79 = vld [vmem:[#allocation5 + $0x40] sm:$0xff]
    %v80 = vld [vmem:[#allocation5 + $0x48] sm:$0xff]
    %v81 = vld [vmem:[#allocation5 + $0x50] sm:$0xff]
    %v82 = vld [vmem:[#allocation5 + $0x58] sm:$0xff]
    %v83 = vld [vmem:[#allocation5 + $0x60] sm:$0xff]
    %v84 = vld [vmem:[#allocation5 + $0x68] sm:$0xff]
    %v85 = vld [vmem:[#allocation5 + $0x70] sm:$0xff]
    %v86 = vld [vmem:[#allocation5 + $0x78] sm:$0xff]
    %v87 = vld [vmem:[#allocation5 + $0x80] sm:$0xff]
    %v88 = vld [vmem:[#allocation5 + $0x88] sm:$0xff]
    %v89 = vld [vmem:[#allocation5 + $0x90] sm:$0xff]
    %v90 = vld [vmem:[#allocation5 + $0x98] sm:$0xff]
    %v91 = vld [vmem:[#allocation5 + $0xa0] sm:$0xff]
    %v92 = vld [vmem:[#allocation5 + $0xa8] sm:$0xff]
    %v93 = vld [vmem:[#allocation5 + $0xb0] sm:$0xff]
    %v94 = vld [vmem:[#allocation5 + $0xb8] sm:$0xff]
    %v95 = vld [vmem:[#allocation5 + $0xc0] sm:$0xff]
    %v96 = vld [vmem:[#allocation5 + $0xc8] sm:$0xff]
    %v97 = vld [vmem:[#allocation5 + $0xd0] sm:$0xff]
    %v98 = vld [vmem:[#allocation5 + $0xd8] sm:$0xff]
    %v99 = vld [vmem:[#allocation5 + $0xe0] sm:$0xff]
    %v100 = vld [vmem:[#allocation5 + $0xe8] sm:$0xff]
    %v101 = vld [vmem:[#allocation5 + $0xf0] sm:$0xff]
    %v102 = vld [vmem:[#allocation5 + $0xf8] sm:$0xff]
    %v103 = vld [vmem:[#allocation5 + $0x100] sm:$0xff]
    %v104 = vld [vmem:[#allocation5 + $0x108] sm:$0xff]
    %v105 = vld [vmem:[#allocation5 + $0x110] sm:$0xff]
    %v106 = vld [vmem:[#allocation5 + $0x118] sm:$0xff]
    %v107 = vld [vmem:[#allocation5 + $0x120] sm:$0xff]
    %v108 = vld [vmem:[#allocation5 + $0x128] sm:$0xff]
    %v109 = vld [vmem:[#allocation5 + $0x130] sm:$0xff]
    %v110 = vld [vmem:[#allocation5 + $0x138] sm:$0xff]
    %v111 = vld [vmem:[#allocation5 + $0x140] sm:$0xff]
    %v112 = vld [vmem:[#allocation5 + $0x148] sm:$0xff]
    %v113 = vld [vmem:[#allocation5 + $0x150] sm:$0xff]
    %v114 = vld [vmem:[#allocation5 + $0x158] sm:$0xff]
    %v115 = vld [vmem:[#allocation5 + $0x160] sm:$0xff]
    %v116 = vld [vmem:[#allocation5 + $0x168] sm:$0xff]
    %v117 = vld [vmem:[#allocation5 + $0x170] sm:$0xff]
    %v118 = vld [vmem:[#allocation5 + $0x178] sm:$0xff]
    %v119 = vld [vmem:[#allocation5 + $0x180] sm:$0xff]
    %v120 = vld [vmem:[#allocation5 + $0x188] sm:$0xff]
    %v121 = vld [vmem:[#allocation5 + $0x190] sm:$0xff]
    %v122 = vld [vmem:[#allocation5 + $0x198] sm:$0xff]
    %v123 = vld [vmem:[#allocation5 + $0x1a0] sm:$0xff]
    %v124 = vld [vmem:[#allocation5 + $0x1a8] sm:$0xff]
    %v125 = vld [vmem:[#allocation5 + $0x1b0] sm:$0xff]
    %v126 = vld [vmem:[#allocation5 + $0x1b8] sm:$0xff]
    %v127 = vld [vmem:[#allocation5 + $0x1c0] sm:$0xff]
    %v128 = vld [vmem:[#allocation5 + $0x1c8] sm:$0xff]
    %v129 = vld [vmem:[#allocation5 + $0x1d0] sm:$0xff]
    %v130 = vld [vmem:[#allocation5 + $0x1d8] sm:$0xff]
    %v131 = vld [vmem:[#allocation5 + $0x1e0] sm:$0xff]
    %v132 = vld [vmem:[#allocation5 + $0x1e8] sm:$0xff]
    %v133 = vld [vmem:[#allocation5 + $0x1f0] sm:$0xff]
    %v134 = vld [vmem:[#allocation5 + $0x1f8] sm:$0xff]
    %v135 = vld [vmem:[#allocation5 + $0x200] sm:$0xff]
    %v136 = vld [vmem:[#allocation5 + $0x208] sm:$0xff]
    %v137 = vld [vmem:[#allocation5 + $0x210] sm:$0xff]
    %v138 = vld [vmem:[#allocation5 + $0x218] sm:$0xff]
    %v139 = vld [vmem:[#allocation5 + $0x220] sm:$0xff]
    %v140 = vld [vmem:[#allocation5 + $0x228] sm:$0xff]
    %v141 = vld [vmem:[#allocation5 + $0x230] sm:$0xff]
    %v142 = vld [vmem:[#allocation5 + $0x238] sm:$0xff]
    %v143 = vld [vmem:[#allocation5 + $0x240] sm:$0xff]
    %v144 = vld [vmem:[#allocation5 + $0x248] sm:$0xff]
    %v145 = vld [vmem:[#allocation5 + $0x250] sm:$0xff]
    %v146 = vld [vmem:[#allocation5 + $0x258] sm:$0xff]
    %v147 = vld [vmem:[#allocation5 + $0x260] sm:$0xff]
    %v148 = vld [vmem:[#allocation5 + $0x268] sm:$0xff]
    %v149 = vld [vmem:[#allocation5 + $0x270] sm:$0xff]
    %v150 = vld [vmem:[#allocation5 + $0x278] sm:$0xff]
    %v151 = vld [vmem:[#allocation5 + $0x280] sm:$0xff]
    %v152 = vld [vmem:[#allocation5 + $0x288] sm:$0xff]
    %v153 = vld [vmem:[#allocation5 + $0x290] sm:$0xff]
    %v154 = vld [vmem:[#allocation5 + $0x298] sm:$0xff]
    %v155 = vld [vmem:[#allocation5 + $0x2a0] sm:$0xff]
    %v156 = vld [vmem:[#allocation5 + $0x2a8] sm:$0xff]
    %v157 = vld [vmem:[#allocation5 + $0x2b0] sm:$0xff]
    %v158 = vld [vmem:[#allocation5 + $0x2b8] sm:$0xff]
    %v159 = vld [vmem:[#allocation5 + $0x2c0] sm:$0xff]
    %v160 = vld [vmem:[#allocation5 + $0x2c8] sm:$0xff]
    %v161 = vld [vmem:[#allocation5 + $0x2d0] sm:$0xff]
    %v162 = vld [vmem:[#allocation5 + $0x2d8] sm:$0xff]
    %v163 = vld [vmem:[#allocation5 + $0x2e0] sm:$0xff]
    %v164 = vld [vmem:[#allocation5 + $0x2e8] sm:$0xff]
    %v165 = vld [vmem:[#allocation5 + $0x2f0] sm:$0xff]
    %v166 = vld [vmem:[#allocation5 + $0x2f8] sm:$0xff]
    %v167 = vld [vmem:[#allocation5 + $0x300] sm:$0xff]
    %v168 = vld [vmem:[#allocation5 + $0x308] sm:$0xff]
    %v169 = vld [vmem:[#allocation5 + $0x310] sm:$0xff]
    %v170 = vld [vmem:[#allocation5 + $0x318] sm:$0xff]
    %v171 = vld [vmem:[#allocation5 + $0x320] sm:$0xff]
    %v172 = vld [vmem:[#allocation5 + $0x328] sm:$0xff]
    %v173 = vld [vmem:[#allocation5 + $0x330] sm:$0xff]
    %v174 = vld [vmem:[#allocation5 + $0x338] sm:$0xff]
    %v175 = vld [vmem:[#allocation5 + $0x340] sm:$0xff]
    %v176 = vld [vmem:[#allocation5 + $0x348] sm:$0xff]
    %v177 = vld [vmem:[#allocation5 + $0x350] sm:$0xff]
    %v178 = vld [vmem:[#allocation5 + $0x358] sm:$0xff]
    %v179 = vld [vmem:[#allocation5 + $0x360] sm:$0xff]
    %v180 = vld [vmem:[#allocation5 + $0x368] sm:$0xff]
    %v181 = vld [vmem:[#allocation5 + $0x370] sm:$0xff]
    %v182 = vld [vmem:[#allocation5 + $0x378] sm:$0xff]
    %v183 = vld [vmem:[%s2] sm:$0x3]
    %v185 = vlaneseq
    %v186 = vshrl.u32 %v185, 7
    %v187 = vsub.s32 0, %v186
    %v188 = vrot.slane %v183, %v187
    %v189 = vlaneseq
    %v190 = vshrl.u32 %v189, 7
    %v191 = vsub.s32 1, %v190
    %v192 = vrot.slane %v183, %v191
    %v203 = vunpack.c.l.b16 %v63
    %v204 = vunpack.c.h.b16 %v63
    %v205 = vunpack.c.l.b16 %v64
    %v206 = vunpack.c.h.b16 %v64
    %v207 = vunpack.c.l.b16 %v65
    %v208 = vunpack.c.h.b16 %v65
    %v209 = vunpack.c.l.b16 %v66
    %v210 = vunpack.c.l.b16 %v67
    %v211 = vunpack.c.h.b16 %v67
    %v212 = vunpack.c.l.b16 %v68
    %v213 = vunpack.c.h.b16 %v68
    %v214 = vunpack.c.l.b16 %v69
    %v215 = vunpack.c.h.b16 %v69
    %v216 = vunpack.c.l.b16 %v70
    %v217 = vpack.c.b16 %v210, %v203
    %v218 = vpack.c.b16 %v211, %v204
    %v219 = vpack.c.b16 %v212, %v205
    %v220 = vpack.c.b16 %v213, %v206
    %v221 = vpack.c.b16 %v214, %v207
    %v222 = vpack.c.b16 %v215, %v208
    %v223 = vpack.c.b16 %v216, %v209
    %v343 = vunpack.c.l.b16 %v71
    %v344 = vunpack.c.h.b16 %v71
    %v345 = vunpack.c.l.b16 %v72
    %v346 = vunpack.c.h.b16 %v72
    %v347 = vunpack.c.l.b16 %v73
    %v348 = vunpack.c.h.b16 %v73
    %v349 = vunpack.c.l.b16 %v74
    %v350 = vunpack.c.h.b16 %v74
    %v351 = vunpack.c.l.b16 %v75
    %v352 = vunpack.c.h.b16 %v75
    %v353 = vunpack.c.l.b16 %v76
    %v354 = vunpack.c.h.b16 %v76
    %v355 = vunpack.c.l.b16 %v77
    %v356 = vunpack.c.h.b16 %v77
    %v357 = vunpack.c.l.b16 %v78
    %v358 = vunpack.c.h.b16 %v78
    %v359 = vunpack.c.l.b16 %v79
    %v360 = vunpack.c.h.b16 %v79
    %v361 = vunpack.c.l.b16 %v80
    %v362 = vunpack.c.h.b16 %v80
    %v363 = vunpack.c.l.b16 %v81
    %v364 = vunpack.c.h.b16 %v81
    %v365 = vunpack.c.l.b16 %v82
    %v366 = vunpack.c.h.b16 %v82
    %v367 = vunpack.c.l.b16 %v83
    %v368 = vunpack.c.h.b16 %v83
    %v369 = vunpack.c.l.b16 %v84
    %v370 = vunpack.c.h.b16 %v84
    %v371 = vunpack.c.l.b16 %v85
    %v372 = vunpack.c.h.b16 %v85
    %v373 = vunpack.c.l.b16 %v86
    %v374 = vunpack.c.h.b16 %v86
    %v375 = vunpack.c.l.b16 %v87
    %v376 = vunpack.c.h.b16 %v87
    %v377 = vunpack.c.l.b16 %v88
    %v378 = vunpack.c.h.b16 %v88
    %v379 = vunpack.c.l.b16 %v89
    %v380 = vunpack.c.h.b16 %v89
    %v381 = vunpack.c.l.b16 %v90
    %v382 = vunpack.c.h.b16 %v90
    %v383 = vunpack.c.l.b16 %v91
    %v384 = vunpack.c.h.b16 %v91
    %v385 = vunpack.c.l.b16 %v92
    %v386 = vunpack.c.h.b16 %v92
    %v387 = vunpack.c.l.b16 %v93
    %v388 = vunpack.c.h.b16 %v93
    %v389 = vunpack.c.l.b16 %v94
    %v390 = vunpack.c.h.b16 %v94
    %v391 = vunpack.c.l.b16 %v95
    %v392 = vunpack.c.h.b16 %v95
    %v393 = vunpack.c.l.b16 %v96
    %v394 = vunpack.c.h.b16 %v96
    %v395 = vunpack.c.l.b16 %v97
    %v396 = vunpack.c.h.b16 %v97
    %v397 = vunpack.c.l.b16 %v98
    %v398 = vunpack.c.h.b16 %v98
    %v399 = vunpack.c.l.b16 %v99
    %v400 = vunpack.c.h.b16 %v99
    %v401 = vunpack.c.l.b16 %v100
    %v402 = vunpack.c.h.b16 %v100
    %v403 = vunpack.c.l.b16 %v101
    %v404 = vunpack.c.h.b16 %v101
    %v405 = vunpack.c.l.b16 %v102
    %v406 = vunpack.c.h.b16 %v102
    %v407 = vunpack.c.l.b16 %v103
    %v408 = vunpack.c.h.b16 %v103
    %v409 = vunpack.c.l.b16 %v104
    %v410 = vunpack.c.h.b16 %v104
    %v411 = vunpack.c.l.b16 %v105
    %v412 = vunpack.c.h.b16 %v105
    %v413 = vunpack.c.l.b16 %v106
    %v414 = vunpack.c.h.b16 %v106
    %v415 = vunpack.c.l.b16 %v107
    %v416 = vunpack.c.h.b16 %v107
    %v417 = vunpack.c.l.b16 %v108
    %v418 = vunpack.c.h.b16 %v108
    %v419 = vunpack.c.l.b16 %v109
    %v420 = vunpack.c.h.b16 %v109
    %v421 = vunpack.c.l.b16 %v110
    %v422 = vunpack.c.h.b16 %v110
    %v423 = vunpack.c.l.b16 %v111
    %v424 = vunpack.c.h.b16 %v111
    %v425 = vunpack.c.l.b16 %v112
    %v426 = vunpack.c.h.b16 %v112
    %v427 = vunpack.c.l.b16 %v113
    %v428 = vunpack.c.h.b16 %v113
    %v429 = vunpack.c.l.b16 %v114
    %v430 = vunpack.c.h.b16 %v114
    %v431 = vunpack.c.l.b16 %v115
    %v432 = vunpack.c.h.b16 %v115
    %v433 = vunpack.c.l.b16 %v116
    %v434 = vunpack.c.h.b16 %v116
    %v435 = vunpack.c.l.b16 %v117
    %v436 = vunpack.c.h.b16 %v117
    %v437 = vunpack.c.l.b16 %v118
    %v438 = vunpack.c.h.b16 %v118
    %v439 = vunpack.c.l.b16 %v119
    %v440 = vunpack.c.h.b16 %v119
    %v441 = vunpack.c.l.b16 %v120
    %v442 = vunpack.c.h.b16 %v120
    %v443 = vunpack.c.l.b16 %v121
    %v444 = vunpack.c.h.b16 %v121
    %v445 = vunpack.c.l.b16 %v122
    %v446 = vunpack.c.h.b16 %v122
    %v447 = vunpack.c.l.b16 %v123
    %v448 = vunpack.c.h.b16 %v123
    %v449 = vunpack.c.l.b16 %v124
    %v450 = vunpack.c.h.b16 %v124
    %v451 = vunpack.c.l.b16 %v125
    %v452 = vunpack.c.h.b16 %v125
    %v453 = vunpack.c.l.b16 %v126
    %v454 = vunpack.c.h.b16 %v126
    %v455 = vunpack.c.l.b16 %v127
    %v456 = vunpack.c.h.b16 %v127
    %v457 = vunpack.c.l.b16 %v128
    %v458 = vunpack.c.h.b16 %v128
    %v459 = vunpack.c.l.b16 %v129
    %v460 = vunpack.c.h.b16 %v129
    %v461 = vunpack.c.l.b16 %v130
    %v462 = vunpack.c.h.b16 %v130
    %v463 = vunpack.c.l.b16 %v131
    %v464 = vunpack.c.h.b16 %v131
    %v465 = vunpack.c.l.b16 %v132
    %v466 = vunpack.c.h.b16 %v132
    %v467 = vunpack.c.l.b16 %v133
    %v468 = vunpack.c.h.b16 %v133
    %v469 = vunpack.c.l.b16 %v134
    %v470 = vunpack.c.h.b16 %v134
    %v471 = vunpack.c.l.b16 %v135
    %v472 = vunpack.c.h.b16 %v135
    %v473 = vunpack.c.l.b16 %v136
    %v474 = vunpack.c.h.b16 %v136
    %v475 = vunpack.c.l.b16 %v137
    %v476 = vunpack.c.h.b16 %v137
    %v477 = vunpack.c.l.b16 %v138
    %v478 = vunpack.c.h.b16 %v138
    %v479 = vunpack.c.l.b16 %v139
    %v480 = vunpack.c.h.b16 %v139
    %v481 = vunpack.c.l.b16 %v140
    %v482 = vunpack.c.h.b16 %v140
    %v483 = vunpack.c.l.b16 %v141
    %v484 = vunpack.c.h.b16 %v141
    %v485 = vunpack.c.l.b16 %v142
    %v486 = vunpack.c.h.b16 %v142
    %v487 = vunpack.c.l.b16 %v143
    %v488 = vunpack.c.h.b16 %v143
    %v489 = vunpack.c.l.b16 %v144
    %v490 = vunpack.c.h.b16 %v144
    %v491 = vunpack.c.l.b16 %v145
    %v492 = vunpack.c.h.b16 %v145
    %v493 = vunpack.c.l.b16 %v146
    %v494 = vunpack.c.h.b16 %v146
    %v495 = vunpack.c.l.b16 %v147
    %v496 = vunpack.c.h.b16 %v147
    %v497 = vunpack.c.l.b16 %v148
    %v498 = vunpack.c.h.b16 %v148
    %v499 = vunpack.c.l.b16 %v149
    %v500 = vunpack.c.h.b16 %v149
    %v501 = vunpack.c.l.b16 %v150
    %v502 = vunpack.c.h.b16 %v150
    %v503 = vunpack.c.l.b16 %v151
    %v504 = vunpack.c.h.b16 %v151
    %v505 = vunpack.c.l.b16 %v152
    %v506 = vunpack.c.h.b16 %v152
    %v507 = vunpack.c.l.b16 %v153
    %v508 = vunpack.c.h.b16 %v153
    %v509 = vunpack.c.l.b16 %v154
    %v510 = vunpack.c.h.b16 %v154
    %v511 = vunpack.c.l.b16 %v155
    %v512 = vunpack.c.h.b16 %v155
    %v513 = vunpack.c.l.b16 %v156
    %v514 = vunpack.c.h.b16 %v156
    %v515 = vunpack.c.l.b16 %v157
    %v516 = vunpack.c.h.b16 %v157
    %v517 = vunpack.c.l.b16 %v158
    %v518 = vunpack.c.h.b16 %v158
    %v519 = vunpack.c.l.b16 %v159
    %v520 = vunpack.c.h.b16 %v159
    %v521 = vunpack.c.l.b16 %v160
    %v522 = vunpack.c.h.b16 %v160
    %v523 = vunpack.c.l.b16 %v161
    %v524 = vunpack.c.h.b16 %v161
    %v525 = vunpack.c.l.b16 %v162
    %v526 = vunpack.c.h.b16 %v162
    %v527 = vunpack.c.l.b16 %v163
    %v528 = vunpack.c.h.b16 %v163
    %v529 = vunpack.c.l.b16 %v164
    %v530 = vunpack.c.h.b16 %v164
    %v531 = vunpack.c.l.b16 %v165
    %v532 = vunpack.c.h.b16 %v165
    %v533 = vunpack.c.l.b16 %v166
    %v534 = vunpack.c.h.b16 %v166
    %v535 = vunpack.c.l.b16 %v167
    %v536 = vunpack.c.h.b16 %v167
    %v537 = vunpack.c.l.b16 %v168
    %v538 = vunpack.c.h.b16 %v168
    %v539 = vunpack.c.l.b16 %v169
    %v540 = vunpack.c.h.b16 %v169
    %v541 = vunpack.c.l.b16 %v170
    %v542 = vunpack.c.h.b16 %v170
    %v543 = vunpack.c.l.b16 %v171
    %v544 = vunpack.c.h.b16 %v171
    %v545 = vunpack.c.l.b16 %v172
    %v546 = vunpack.c.h.b16 %v172
    %v547 = vunpack.c.l.b16 %v173
    %v548 = vunpack.c.h.b16 %v173
    %v549 = vunpack.c.l.b16 %v174
    %v550 = vunpack.c.h.b16 %v174
    %v551 = vunpack.c.l.b16 %v175
    %v552 = vunpack.c.h.b16 %v175
    %v553 = vunpack.c.l.b16 %v176
    %v554 = vunpack.c.h.b16 %v176
    %v555 = vunpack.c.l.b16 %v177
    %v556 = vunpack.c.h.b16 %v177
    %v557 = vunpack.c.l.b16 %v178
    %v558 = vunpack.c.h.b16 %v178
    %v559 = vunpack.c.l.b16 %v179
    %v560 = vunpack.c.h.b16 %v179
    %v561 = vunpack.c.l.b16 %v180
    %v562 = vunpack.c.h.b16 %v180
    %v563 = vunpack.c.l.b16 %v181
    %v564 = vunpack.c.h.b16 %v181
    %v565 = vunpack.c.l.b16 %v182
    %v566 = vunpack.c.h.b16 %v182
    %v567 = vpack.c.b16 %v345, %v343
    %v568 = vpack.c.b16 %v346, %v344
    %v569 = vpack.c.b16 %v349, %v347
    %v570 = vpack.c.b16 %v350, %v348
    %v571 = vpack.c.b16 %v353, %v351
    %v572 = vpack.c.b16 %v354, %v352
    %v573 = vpack.c.b16 %v357, %v355
    %v574 = vpack.c.b16 %v358, %v356
    %v575 = vpack.c.b16 %v361, %v359
    %v576 = vpack.c.b16 %v362, %v360
    %v577 = vpack.c.b16 %v365, %v363
    %v578 = vpack.c.b16 %v366, %v364
    %v579 = vpack.c.b16 %v369, %v367
    %v580 = vpack.c.b16 %v370, %v368
    %v581 = vpack.c.b16 %v373, %v371
    %v582 = vpack.c.b16 %v374, %v372
    %v583 = vpack.c.b16 %v377, %v375
    %v584 = vpack.c.b16 %v378, %v376
    %v585 = vpack.c.b16 %v381, %v379
    %v586 = vpack.c.b16 %v382, %v380
    %v587 = vpack.c.b16 %v385, %v383
    %v588 = vpack.c.b16 %v386, %v384
    %v589 = vpack.c.b16 %v389, %v387
    %v590 = vpack.c.b16 %v390, %v388
    %v591 = vpack.c.b16 %v393, %v391
    %v592 = vpack.c.b16 %v394, %v392
    %v593 = vpack.c.b16 %v397, %v395
    %v594 = vpack.c.b16 %v398, %v396
    %v595 = vpack.c.b16 %v401, %v399
    %v596 = vpack.c.b16 %v402, %v400
    %v597 = vpack.c.b16 %v405, %v403
    %v598 = vpack.c.b16 %v406, %v404
    %v599 = vpack.c.b16 %v409, %v407
    %v600 = vpack.c.b16 %v410, %v408
    %v601 = vpack.c.b16 %v413, %v411
    %v602 = vpack.c.b16 %v414, %v412
    %v603 = vpack.c.b16 %v417, %v415
    %v604 = vpack.c.b16 %v418, %v416
    %v605 = vpack.c.b16 %v421, %v419
    %v606 = vpack.c.b16 %v422, %v420
    %v607 = vpack.c.b16 %v425, %v423
    %v608 = vpack.c.b16 %v426, %v424
    %v609 = vpack.c.b16 %v429, %v427
    %v610 = vpack.c.b16 %v430, %v428
    %v611 = vpack.c.b16 %v433, %v431
    %v612 = vpack.c.b16 %v434, %v432
    %v613 = vpack.c.b16 %v437, %v435
    %v614 = vpack.c.b16 %v438, %v436
    %v615 = vpack.c.b16 %v441, %v439
    %v616 = vpack.c.b16 %v442, %v440
    %v617 = vpack.c.b16 %v445, %v443
    %v618 = vpack.c.b16 %v446, %v444
    %v619 = vpack.c.b16 %v449, %v447
    %v620 = vpack.c.b16 %v450, %v448
    %v621 = vpack.c.b16 %v453, %v451
    %v622 = vpack.c.b16 %v454, %v452
    %v623 = vpack.c.b16 %v457, %v455
    %v624 = vpack.c.b16 %v458, %v456
    %v625 = vpack.c.b16 %v461, %v459
    %v626 = vpack.c.b16 %v462, %v460
    %v627 = vpack.c.b16 %v465, %v463
    %v628 = vpack.c.b16 %v466, %v464
    %v629 = vpack.c.b16 %v469, %v467
    %v630 = vpack.c.b16 %v470, %v468
    %v631 = vpack.c.b16 %v473, %v471
    %v632 = vpack.c.b16 %v474, %v472
    %v633 = vpack.c.b16 %v477, %v475
    %v634 = vpack.c.b16 %v478, %v476
    %v635 = vpack.c.b16 %v481, %v479
    %v636 = vpack.c.b16 %v482, %v480
    %v637 = vpack.c.b16 %v485, %v483
    %v638 = vpack.c.b16 %v486, %v484
    %v639 = vpack.c.b16 %v489, %v487
    %v640 = vpack.c.b16 %v490, %v488
    %v641 = vpack.c.b16 %v493, %v491
    %v642 = vpack.c.b16 %v494, %v492
    %v643 = vpack.c.b16 %v497, %v495
    %v644 = vpack.c.b16 %v498, %v496
    %v645 = vpack.c.b16 %v501, %v499
    %v646 = vpack.c.b16 %v502, %v500
    %v647 = vpack.c.b16 %v505, %v503
    %v648 = vpack.c.b16 %v506, %v504
    %v649 = vpack.c.b16 %v509, %v507
    %v650 = vpack.c.b16 %v510, %v508
    %v651 = vpack.c.b16 %v513, %v511
    %v652 = vpack.c.b16 %v514, %v512
    %v653 = vpack.c.b16 %v517, %v515
    %v654 = vpack.c.b16 %v518, %v516
    %v655 = vpack.c.b16 %v521, %v519
    %v656 = vpack.c.b16 %v522, %v520
    %v657 = vpack.c.b16 %v525, %v523
    %v658 = vpack.c.b16 %v526, %v524
    %v659 = vpack.c.b16 %v529, %v527
    %v660 = vpack.c.b16 %v530, %v528
    %v661 = vpack.c.b16 %v533, %v531
    %v662 = vpack.c.b16 %v534, %v532
    %v663 = vpack.c.b16 %v537, %v535
    %v664 = vpack.c.b16 %v538, %v536
    %v665 = vpack.c.b16 %v541, %v539
    %v666 = vpack.c.b16 %v542, %v540
    %v667 = vpack.c.b16 %v545, %v543
    %v668 = vpack.c.b16 %v546, %v544
    %v669 = vpack.c.b16 %v549, %v547
    %v670 = vpack.c.b16 %v550, %v548
    %v671 = vpack.c.b16 %v553, %v551
    %v672 = vpack.c.b16 %v554, %v552
    %v673 = vpack.c.b16 %v557, %v555
    %v674 = vpack.c.b16 %v558, %v556
    %v675 = vpack.c.b16 %v561, %v559
    %v676 = vpack.c.b16 %v562, %v560
    %v677 = vpack.c.b16 %v565, %v563
    %v678 = vpack.c.b16 %v566, %v564
    %791 = vmatprep.subr.bf16.mxu0 %v582
    %792 = vmatpush1.bf16.msra.mxu0 %v581
    %793 = vmatprep.subr.bf16.mxu0 %v580
    %794 = vmatpush1.bf16.msra.mxu0 %v579
    %795 = vmatprep.subr.bf16.mxu0 %v578
    %796 = vmatpush1.bf16.msra.mxu0 %v577
    %797 = vmatprep.subr.bf16.mxu0 %v576
    %798 = vmatpush1.bf16.msra.mxu0 %v575
    %799 = vmatprep.subr.bf16.mxu0 %v574
    %800 = vmatpush1.bf16.msra.mxu0 %v573
    %801 = vmatprep.subr.bf16.mxu0 %v572
    %802 = vmatpush1.bf16.msra.mxu0 %v571
    %803 = vmatprep.subr.bf16.mxu0 %v570
    %804 = vmatpush1.bf16.msra.mxu0 %v569
    %805 = vmatprep.subr.bf16.mxu0 %v568
    %806 = vmatpush1.bf16.msra.mxu0 %v567
    %807 = vmatprep.subr.bf16.mxu0 %v598
    %808 = vmatpush2.bf16.msra.mxu0 %v597
    %809 = vmatprep.subr.bf16.mxu0 %v596
    %810 = vmatpush2.bf16.msra.mxu0 %v595
    %811 = vmatprep.subr.bf16.mxu0 %v594
    %812 = vmatpush2.bf16.msra.mxu0 %v593
    %813 = vmatprep.subr.bf16.mxu0 %v592
    %814 = vmatpush2.bf16.msra.mxu0 %v591
    %815 = vmatprep.subr.bf16.mxu0 %v590
    %816 = vmatpush2.bf16.msra.mxu0 %v589
    %817 = vmatprep.subr.bf16.mxu0 %v588
    %818 = vmatpush2.bf16.msra.mxu0 %v587
    %819 = vmatprep.subr.bf16.mxu0 %v586
    %820 = vmatpush2.bf16.msra.mxu0 %v585
    %821 = vmatprep.subr.bf16.mxu0 %v584
    %822 = vmatpush2.bf16.msra.mxu0 %v583
    %823 = vmatprep.mubr.bf16.mxu0 %v218
    %824 = vmatmul.mubr.bf16.gmra.mxu0 %v217
    %v825 = vpop.f32.mrf.mxu0
    %v826 = vadd.f32 %v188, %v825
    %v827 = vpop.f32.mrf.mxu0
    %v828 = vadd.f32 %v192, %v827
    %v829 = vpop.f32.mrf.mxu0
    %v830 = vadd.f32 %v188, %v829
    %v831 = vpop.f32.mrf.mxu0
    %v832 = vadd.f32 %v192, %v831
    %833 = vdwg.mxu0
    %834 = vmatprep.subr.bf16.mxu0 %v614
    %835 = vmatpush1.bf16.msra.mxu0 %v613
    %836 = vmatprep.subr.bf16.mxu0 %v612
    %837 = vmatpush1.bf16.msra.mxu0 %v611
    %838 = vmatprep.subr.bf16.mxu0 %v610
    %839 = vmatpush1.bf16.msra.mxu0 %v609
    %840 = vmatprep.subr.bf16.mxu0 %v608
    %841 = vmatpush1.bf16.msra.mxu0 %v607
    %842 = vmatprep.subr.bf16.mxu0 %v606
    %843 = vmatpush1.bf16.msra.mxu0 %v605
    %844 = vmatprep.subr.bf16.mxu0 %v604
    %845 = vmatpush1.bf16.msra.mxu0 %v603
    %846 = vmatprep.subr.bf16.mxu0 %v602
    %847 = vmatpush1.bf16.msra.mxu0 %v601
    %848 = vmatprep.subr.bf16.mxu0 %v600
    %849 = vmatpush1.bf16.msra.mxu0 %v599
    %850 = vmatprep.subr.bf16.mxu0 %v630
    %851 = vmatpush2.bf16.msra.mxu0 %v629
    %852 = vmatprep.subr.bf16.mxu0 %v628
    %853 = vmatpush2.bf16.msra.mxu0 %v627
    %854 = vmatprep.subr.bf16.mxu0 %v626
    %855 = vmatpush2.bf16.msra.mxu0 %v625
    %856 = vmatprep.subr.bf16.mxu0 %v624
    %857 = vmatpush2.bf16.msra.mxu0 %v623
    %858 = vmatprep.subr.bf16.mxu0 %v622
    %859 = vmatpush2.bf16.msra.mxu0 %v621
    %860 = vmatprep.subr.bf16.mxu0 %v620
    %861 = vmatpush2.bf16.msra.mxu0 %v619
    %862 = vmatprep.subr.bf16.mxu0 %v618
    %863 = vmatpush2.bf16.msra.mxu0 %v617
    %864 = vmatprep.subr.bf16.mxu0 %v616
    %865 = vmatpush2.bf16.msra.mxu0 %v615
    %866 = vmatprep.mubr.bf16.mxu0 %v220
    %867 = vmatmul.mubr.bf16.gmra.mxu0 %v219
    %v868 = vpop.f32.mrf.mxu0
    %v869 = vadd.f32 %v826, %v868
    %v870 = vpop.f32.mrf.mxu0
    %v871 = vadd.f32 %v828, %v870
    %v872 = vpop.f32.mrf.mxu0
    %v873 = vadd.f32 %v830, %v872
    %v874 = vpop.f32.mrf.mxu0
    %v875 = vadd.f32 %v832, %v874
    %876 = vdwg.mxu0
    %877 = vmatprep.subr.bf16.mxu0 %v646
    %878 = vmatpush1.bf16.msra.mxu0 %v645
    %879 = vmatprep.subr.bf16.mxu0 %v644
    %880 = vmatpush1.bf16.msra.mxu0 %v643
    %881 = vmatprep.subr.bf16.mxu0 %v642
    %882 = vmatpush1.bf16.msra.mxu0 %v641
    %883 = vmatprep.subr.bf16.mxu0 %v640
    %884 = vmatpush1.bf16.msra.mxu0 %v639
    %885 = vmatprep.subr.bf16.mxu0 %v638
    %886 = vmatpush1.bf16.msra.mxu0 %v637
    %887 = vmatprep.subr.bf16.mxu0 %v636
    %888 = vmatpush1.bf16.msra.mxu0 %v635
    %889 = vmatprep.subr.bf16.mxu0 %v634
    %890 = vmatpush1.bf16.msra.mxu0 %v633
    %891 = vmatprep.subr.bf16.mxu0 %v632
    %892 = vmatpush1.bf16.msra.mxu0 %v631
    %893 = vmatprep.subr.bf16.mxu0 %v662
    %894 = vmatpush2.bf16.msra.mxu0 %v661
    %895 = vmatprep.subr.bf16.mxu0 %v660
    %896 = vmatpush2.bf16.msra.mxu0 %v659
    %897 = vmatprep.subr.bf16.mxu0 %v658
    %898 = vmatpush2.bf16.msra.mxu0 %v657
    %899 = vmatprep.subr.bf16.mxu0 %v656
    %900 = vmatpush2.bf16.msra.mxu0 %v655
    %901 = vmatprep.subr.bf16.mxu0 %v654
    %902 = vmatpush2.bf16.msra.mxu0 %v653
    %903 = vmatprep.subr.bf16.mxu0 %v652
    %904 = vmatpush2.bf16.msra.mxu0 %v651
    %905 = vmatprep.subr.bf16.mxu0 %v650
    %906 = vmatpush2.bf16.msra.mxu0 %v649
    %907 = vmatprep.subr.bf16.mxu0 %v648
    %908 = vmatpush2.bf16.msra.mxu0 %v647
    %909 = vmatprep.mubr.bf16.mxu0 %v222
    %910 = vmatmul.mubr.bf16.gmra.mxu0 %v221
    %v911 = vpop.f32.mrf.mxu0
    %v912 = vadd.f32 %v869, %v911
    %v913 = vpop.f32.mrf.mxu0
    %v914 = vadd.f32 %v871, %v913
    %v915 = vpop.f32.mrf.mxu0
    %v916 = vadd.f32 %v873, %v915
    %v917 = vpop.f32.mrf.mxu0
    %v918 = vadd.f32 %v875, %v917
    %919 = vdwg.mxu0
    %920 = vmatprep.subr.bf16.mxu0 %v678
    %921 = vmatpush1.bf16.msra.mxu0 %v677
    %922 = vmatprep.subr.bf16.mxu0 %v676
    %923 = vmatpush1.bf16.msra.mxu0 %v675
    %924 = vmatprep.subr.bf16.mxu0 %v674
    %925 = vmatpush1.bf16.msra.mxu0 %v673
    %926 = vmatprep.subr.bf16.mxu0 %v672
    %927 = vmatpush1.bf16.msra.mxu0 %v671
    %928 = vmatprep.subr.bf16.mxu0 %v670
    %929 = vmatpush1.bf16.msra.mxu0 %v669
    %930 = vmatprep.subr.bf16.mxu0 %v668
    %931 = vmatpush1.bf16.msra.mxu0 %v667
    %932 = vmatprep.subr.bf16.mxu0 %v666
    %933 = vmatpush1.bf16.msra.mxu0 %v665
    %934 = vmatprep.subr.bf16.mxu0 %v664
    %935 = vmatpush1.bf16.msra.mxu0 %v663
    %936 = vmatprep.subr.bf16.mxu0 0
    %937 = vmatpush2.bf16.msra.mxu0 0
    %938 = vmatprep.subr.bf16.mxu0 0
    %939 = vmatpush2.bf16.msra.mxu0 0
    %940 = vmatprep.subr.bf16.mxu0 0
    %941 = vmatpush2.bf16.msra.mxu0 0
    %942 = vmatprep.subr.bf16.mxu0 0
    %943 = vmatpush2.bf16.msra.mxu0 0
    %944 = vmatprep.subr.bf16.mxu0 0
    %945 = vmatpush2.bf16.msra.mxu0 0
    %946 = vmatprep.subr.bf16.mxu0 0
    %947 = vmatpush2.bf16.msra.mxu0 0
    %948 = vmatprep.subr.bf16.mxu0 0
    %949 = vmatpush2.bf16.msra.mxu0 0
    %950 = vmatprep.subr.bf16.mxu0 0
    %951 = vmatpush2.bf16.msra.mxu0 0
    %952 = vmatprep.mubr.bf16.mxu0 0
    %953 = vmatmul.mubr.bf16.gmra.mxu0 %v223
    %v954 = vpop.f32.mrf.mxu0
    %v955 = vadd.f32 %v912, %v954
    %v956 = vpop.f32.mrf.mxu0
    %v957 = vadd.f32 %v914, %v956
    %v958 = vpop.f32.mrf.mxu0
    %v959 = vadd.f32 %v916, %v958
    %v960 = vpop.f32.mrf.mxu0
    %v961 = vadd.f32 %v918, %v960
    %962 = vdwg.mxu0
    %v963 = vmax.f32 %v955, 0.0
    %v964 = vmax.f32 %v957, 0.0
    %v965 = vmax.f32 %v959, 0.0
    %v966 = vmax.f32 %v961, 0.0
    %v967 = vpack.c.bf16 %v965, %v963
    %v968 = vpack.c.bf16 %v966, %v964
    %v969 = vld [vmem:[#allocation7] sm:$0xf]
    %v970 = vld [vmem:[#allocation7 + $0x4] sm:$0xf]
    %v971 = vld [vmem:[#allocation7 + $0x8] sm:$0xf]
    %v972 = vld [vmem:[#allocation7 + $0xc] sm:$0xf]
    %v973 = vld [vmem:[#allocation7 + $0x10] sm:$0xf]
    %v974 = vld [vmem:[#allocation7 + $0x14] sm:$0xf]
    %v975 = vld [vmem:[#allocation7 + $0x18] sm:$0xf]
    %v976 = vld [vmem:[#allocation7 + $0x1c] sm:$0xf]
    %v977 = vld [vmem:[#allocation7 + $0x20] sm:$0xf]
    %v978 = vld [vmem:[#allocation7 + $0x24] sm:$0xf]
    %v979 = vld [vmem:[#allocation7 + $0x28] sm:$0xf]
    %v980 = vld [vmem:[#allocation7 + $0x2c] sm:$0xf]
    %v981 = vld [vmem:[#allocation7 + $0x30] sm:$0xf]
    %v982 = vld [vmem:[#allocation7 + $0x34] sm:$0xf]
    %v983 = vld [vmem:[#allocation7 + $0x38] sm:$0xf]
    %v984 = vld [vmem:[#allocation7 + $0x3c] sm:$0xf]
    %v985 = vld [vmem:[#allocation7 + $0x40] sm:$0xf]
    %v986 = vld [vmem:[#allocation7 + $0x44] sm:$0xf]
    %v987 = vld [vmem:[#allocation7 + $0x48] sm:$0xf]
    %v988 = vld [vmem:[#allocation7 + $0x4c] sm:$0xf]
    %v989 = vld [vmem:[#allocation7 + $0x50] sm:$0xf]
    %v990 = vld [vmem:[#allocation7 + $0x54] sm:$0xf]
    %v991 = vld [vmem:[#allocation7 + $0x58] sm:$0xf]
    %v992 = vld [vmem:[#allocation7 + $0x5c] sm:$0xf]
    %v993 = vld [vmem:[#allocation7 + $0x60] sm:$0xf]
    %v994 = vld [vmem:[#allocation7 + $0x64] sm:$0xf]
    %v995 = vld [vmem:[#allocation7 + $0x68] sm:$0xf]
    %v996 = vld [vmem:[#allocation7 + $0x6c] sm:$0xf]
    %v997 = vld [vmem:[#allocation7 + $0x70] sm:$0xf]
    %v998 = vld [vmem:[#allocation7 + $0x74] sm:$0xf]
    %v999 = vld [vmem:[#allocation7 + $0x78] sm:$0xf]
    %v1000 = vld [vmem:[#allocation7 + $0x7c] sm:$0xf]
    %v1001 = vld [vmem:[%s4] sm:$0x1]
    %v1003 = vlaneseq
    %v1004 = vshrl.u32 %v1003, 7
    %v1005 = vsub.s32 0, %v1004
    %v1006 = vrot.slane %v1001, %v1005
    %v1040 = vunpack.c.l.b16 %v969
    %v1041 = vunpack.c.l.b16 %v970
    %v1042 = vunpack.c.l.b16 %v971
    %v1043 = vunpack.c.l.b16 %v972
    %v1044 = vunpack.c.l.b16 %v973
    %v1045 = vunpack.c.l.b16 %v974
    %v1046 = vunpack.c.l.b16 %v975
    %v1047 = vunpack.c.l.b16 %v976
    %v1048 = vunpack.c.l.b16 %v977
    %v1049 = vunpack.c.l.b16 %v978
    %v1050 = vunpack.c.l.b16 %v979
    %v1051 = vunpack.c.l.b16 %v980
    %v1052 = vunpack.c.l.b16 %v981
    %v1053 = vunpack.c.l.b16 %v982
    %v1054 = vunpack.c.l.b16 %v983
    %v1055 = vunpack.c.l.b16 %v984
    %v1056 = vunpack.c.l.b16 %v985
    %v1057 = vunpack.c.l.b16 %v986
    %v1058 = vunpack.c.l.b16 %v987
    %v1059 = vunpack.c.l.b16 %v988
    %v1060 = vunpack.c.l.b16 %v989
    %v1061 = vunpack.c.l.b16 %v990
    %v1062 = vunpack.c.l.b16 %v991
    %v1063 = vunpack.c.l.b16 %v992
    %v1064 = vunpack.c.l.b16 %v993
    %v1065 = vunpack.c.l.b16 %v994
    %v1066 = vunpack.c.l.b16 %v995
    %v1067 = vunpack.c.l.b16 %v996
    %v1068 = vunpack.c.l.b16 %v997
    %v1069 = vunpack.c.l.b16 %v998
    %v1070 = vunpack.c.l.b16 %v999
    %v1071 = vunpack.c.l.b16 %v1000
    %v1072 = vpack.c.b16 %v1041, %v1040
    %v1073 = vpack.c.b16 %v1043, %v1042
    %v1074 = vpack.c.b16 %v1045, %v1044
    %v1075 = vpack.c.b16 %v1047, %v1046
    %v1076 = vpack.c.b16 %v1049, %v1048
    %v1077 = vpack.c.b16 %v1051, %v1050
    %v1078 = vpack.c.b16 %v1053, %v1052
    %v1079 = vpack.c.b16 %v1055, %v1054
    %v1080 = vpack.c.b16 %v1057, %v1056
    %v1081 = vpack.c.b16 %v1059, %v1058
    %v1082 = vpack.c.b16 %v1061, %v1060
    %v1083 = vpack.c.b16 %v1063, %v1062
    %v1084 = vpack.c.b16 %v1065, %v1064
    %v1085 = vpack.c.b16 %v1067, %v1066
    %v1086 = vpack.c.b16 %v1069, %v1068
    %v1087 = vpack.c.b16 %v1071, %v1070
    %1104 = vmatprep.subr.bf16.mxu0 0
    %1105 = vmatpush1.bf16.msra.mxu0 %v1079
    %1106 = vmatprep.subr.bf16.mxu0 0
    %1107 = vmatpush1.bf16.msra.mxu0 %v1078
    %1108 = vmatprep.subr.bf16.mxu0 0
    %1109 = vmatpush1.bf16.msra.mxu0 %v1077
    %1110 = vmatprep.subr.bf16.mxu0 0
    %1111 = vmatpush1.bf16.msra.mxu0 %v1076
    %1112 = vmatprep.subr.bf16.mxu0 0
    %1113 = vmatpush1.bf16.msra.mxu0 %v1075
    %1114 = vmatprep.subr.bf16.mxu0 0
    %1115 = vmatpush1.bf16.msra.mxu0 %v1074
    %1116 = vmatprep.subr.bf16.mxu0 0
    %1117 = vmatpush1.bf16.msra.mxu0 %v1073
    %1118 = vmatprep.subr.bf16.mxu0 0
    %1119 = vmatpush1.bf16.msra.mxu0 %v1072
    %1120 = vmatprep.subr.bf16.mxu0 0
    %1121 = vmatpush2.bf16.msra.mxu0 %v1087
    %1122 = vmatprep.subr.bf16.mxu0 0
    %1123 = vmatpush2.bf16.msra.mxu0 %v1086
    %1124 = vmatprep.subr.bf16.mxu0 0
    %1125 = vmatpush2.bf16.msra.mxu0 %v1085
    %1126 = vmatprep.subr.bf16.mxu0 0
    %1127 = vmatpush2.bf16.msra.mxu0 %v1084
    %1128 = vmatprep.subr.bf16.mxu0 0
    %1129 = vmatpush2.bf16.msra.mxu0 %v1083
    %1130 = vmatprep.subr.bf16.mxu0 0
    %1131 = vmatpush2.bf16.msra.mxu0 %v1082
    %1132 = vmatprep.subr.bf16.mxu0 0
    %1133 = vmatpush2.bf16.msra.mxu0 %v1081
    %1134 = vmatprep.subr.bf16.mxu0 0
    %1135 = vmatpush2.bf16.msra.mxu0 %v1080
    %1136 = vmatprep.mubr.bf16.mxu0 %v968
    %1137 = vmatmul.mubr.bf16.gmra.mxu0 %v967
    %v1138 = vpop.f32.mrf.mxu0
    %v1139 = vadd.f32 %v1006, %v1138
    %v1140 = vpop.f32.mrf.mxu0
    %v1141 = vpop.f32.mrf.mxu0
    %v1142 = vadd.f32 %v1006, %v1141
    %v1143 = vpop.f32.mrf.mxu0
    %1144 = vdwg.mxu0
    %v1145 = vmax.f32 %v1139, 0.0
    %v1146 = vmax.f32 %v1142, 0.0
    %1147 = vst [vmem:[#allocation8] sm:$0xff] %v1145
    %1148 = vst [vmem:[#allocation8 + $0x8] sm:$0xff] %v1146
    // Predicated region
    $region34: #{tpu_custom_call.1} parent=1 // pred_check
      _
    $region35: #{tpu_custom_call.1} parent=1 // pred_check_branch
      %1150 = sbr.rel (0) target = $region37
    $region36: #{tpu_custom_call.1} parent=1 // pred_region
      %s1152 = ssub.s32 256, 256
      %1153 = vsyncadd [#allocation4], %s1152
      %s1154 = sshll.u32 [#allocation8], 4
      %s1155 = int_to_ptr.vmem [resolvable:$true] %s1154
      %1160 = dma.vmem_to_hbm [thread:$0]  %s1155, 256, %s5, [#allocation4], 128, 128, 8
    $region37: #{tpu_custom_call.1} parent=1 // pred_fallthru
      _
    // Predicated region
    $region38: #{tpu_custom_call.1} parent=1 // pred_check
      _
    $region39: #{tpu_custom_call.1} parent=1 // pred_check_branch
      %1162 = sbr.rel (0) target = $region41
    $region40: #{tpu_custom_call.1} parent=1 // pred_region
      %1163 = dma.done [#allocation4], 256
    $region41: #{tpu_custom_call.1} parent=1 // pred_fallthru
      _
    %1164 = vsyncpa [#allocation3], 1
    %1165 = vsyncpa [#allocation6], 1
    %1166 = vsyncpa [#allocation4], 1

</llo_original>
